<compile_context>
chip_gen: v7x
topology: tpu7x:2x2x1
jax: 0.10.0
libtpu: 0.0.40
codegen_flags: <defaults>
</compile_context>

<pallas_src>
import jax
import jax.numpy as jnp
from jax.experimental import pallas as pl
from jax.experimental.pallas import tpu as pltpu


def _embed_kernel(patch_ref, w_ref, pos_ref, out_ref):
    # patch_ref: (TM, K) bf16  -- row tile of flattened patches
    # w_ref:     (K, D)  bf16  -- flattened conv weight (resident across steps)
    # pos_ref:   (TM, D) bf16  -- position embedding + folded conv bias tile
    # out_ref:   (TM, D) out_dtype
    proj = jnp.dot(patch_ref[...], w_ref[...],
                   preferred_element_type=jnp.float32)            # MXU, f32 acc
    out_ref[...] = (proj + pos_ref[...].astype(jnp.float32)).astype(out_ref.dtype)


def _choose_row_tile(n, b):
    """Row-tile (TM) heuristic.

    * n <= 256: a single full-N tile (full-dim blocks are always legal, and
      per-call overhead dominates at tiny N anyway).
    * otherwise: the largest candidate that divides n exactly (fewest ~0.35us
      grid steps on single-TC v5e/v6e; e.g. 192 when n == 576), falling back to
      256 with a ragged, store-masked final block.
    * keep the total step count even and >= 4 so both v7x TensorCores get work
      even at batch == 1 (halve the tile until that holds); all candidates and
      their halves stay multiples of 16 (bf16 sublane packing).
    """
    if n <= 256:
        return n
    tm = next((t for t in (512, 384, 320, 256, 192) if n % t == 0), 256)
    while tm > 96 and (b * pl.cdiv(n, tm) < 4 or (b * pl.cdiv(n, tm)) % 2 != 0):
        tm //= 2
    return tm


def siglip_vision_embeddings(pixel_values, conv_weight, conv_bias, pos_emb,
                             patch_size, out_dtype=None):
    """pixel_values: (B, C, H, W) NCHW like PyTorch.
       conv_weight: (D, C, P, P), conv_bias: (D,), pos_emb: (N, D).
       Returns (B, N, D) in `out_dtype` (default: pixel_values.dtype)."""
    B, C, H, W = pixel_values.shape
    P = patch_size
    Hp, Wp = H // P, W // P
    N = Hp * Wp
    D = conv_weight.shape[0]
    K = C * P * P
    out_dtype = pixel_values.dtype if out_dtype is None else out_dtype

    # im2col in JAX: cast first so the fused cast+transpose pass moves bf16
    # bytes; no jnp.pad copies follow (K is un-tiled, N remainder is ragged).
    x = pixel_values.astype(jnp.bfloat16)
    x = x.reshape(B, C, Hp, P, Wp, P).transpose(0, 2, 4, 1, 3, 5)  # (B,Hp,Wp,C,P,P)
    patches = x.reshape(B, N, K)                                   # (B, N, K) bf16

    # Conv weight (D, C, P, P) -> (K, D) so conv == patches @ w_mat.
    w_mat = conv_weight.reshape(D, K).T.astype(jnp.bfloat16)       # (K, D) bf16

    # Fold conv bias into the position table (f32 add), then stream as bf16.
    pos_plus_bias = (pos_emb.astype(jnp.float32)
                     + conv_bias.astype(jnp.float32)[None, :]).astype(jnp.bfloat16)

    TM = _choose_row_tile(N, B)
    n_row_tiles = pl.cdiv(N, TM)
    # Row tile outermost, batch innermost: pos/weight block indices are
    # constant across consecutive inner steps -> fetched once, not per batch.
    grid = (n_row_tiles, B)

    out_itemsize = jnp.dtype(out_dtype).itemsize
    est_vmem = (2 * K * D * 2        # conv weight (double-buffered by pipeline)
                + 2 * TM * K * 2     # patch row tiles (bf16)
                + 2 * TM * D * 2     # pos(+bias) tiles (bf16)
                + 2 * TM * D * out_itemsize)
    vmem_limit = int(min(48 << 20, max(32 << 20, 2 * est_vmem)))

    return pl.pallas_call(
        _embed_kernel,
        out_shape=jax.ShapeDtypeStruct((B, N, D), out_dtype),
        grid_spec=pltpu.PrefetchScalarGridSpec(
            num_scalar_prefetch=0,
            grid=grid,
            in_specs=[
                # Patch row tile; leading batch dim squeezed; K left un-tiled.
                pl.BlockSpec((None, TM, K), lambda j, b: (b, j, 0)),
                # Weight: constant block index -> stays resident in VMEM.
                pl.BlockSpec((K, D), lambda j, b: (0, 0)),
                # Position (+bias) row tile: constant across inner batch axis.
                pl.BlockSpec((TM, D), lambda j, b: (j, 0)),
            ],
            out_specs=pl.BlockSpec((None, TM, D), lambda j, b: (b, j, 0)),
        ),
        compiler_params=pltpu.CompilerParams(
            dimension_semantics=("parallel", "parallel"),
            vmem_limit_bytes=vmem_limit),
    )(patches, w_mat, pos_plus_bias)


def reference(pixel_values, conv_weight, conv_bias, pos_emb, patch_size):
    """Pure-JAX f32 reference matching the PyTorch forward."""
    out = jax.lax.conv_general_dilated(
        pixel_values, conv_weight,
        window_strides=(patch_size, patch_size),
        padding="VALID",
        dimension_numbers=("NCHW", "OIHW", "NCHW"),
    ) + conv_bias[None, :, None, None]
    B, D, Hp, Wp = out.shape
    out = out.reshape(B, D, Hp * Wp).transpose(0, 2, 1)            # (B, N, D)
    return out + pos_emb[None]


if __name__ == "__main__":
    # Small config consistent with the module: image 16x16, patch 4 -> 16 patches.
    batch, channels, image_size, patch_size, hidden = 2, 4, 16, 4, 32
    num_patches = (image_size // patch_size) ** 2

    key = jax.random.PRNGKey(0)
    k_x, k_w, k_b, k_p = jax.random.split(key, 4)

    pixel_values = jax.random.normal(
        k_x, (batch, channels, image_size, image_size), dtype=jnp.float32)
    conv_weight = jax.random.normal(
        k_w, (hidden, channels, patch_size, patch_size), dtype=jnp.float32) * 0.02
    conv_bias = jax.random.normal(k_b, (hidden,), dtype=jnp.float32) * 0.02
    pos_emb = jax.random.normal(
        k_p, (num_patches, hidden), dtype=jnp.float32) * 0.02

    out = siglip_vision_embeddings(pixel_values, conv_weight, conv_bias,
                                   pos_emb, patch_size)
    out = jax.block_until_ready(out)

    ref = reference(pixel_values, conv_weight, conv_bias, pos_emb, patch_size)
    assert out.shape == (batch, num_patches, hidden), out.shape
    # bf16 MXU operands + bf16 pos stream (f32 accumulate/add) vs f32 reference.
    assert jnp.allclose(out, ref, atol=2e-2, rtol=2e-2), \
        float(jnp.max(jnp.abs(out - ref)))

    print("KERNEL_OK")
</pallas_src>

<mosaic_0001>
module attributes {stable_mosaic.version = 11 : i64} {
  func.func @_embed_kernel(%arg0: i32, %arg1: i32, %arg2: memref<1x16x64xbf16, #tpu.memory_space<vmem>>, %arg3: memref<64x32xbf16, #tpu.memory_space<vmem>>, %arg4: memref<16x32xbf16, #tpu.memory_space<vmem>>, %arg5: memref<1x16x32xf32, #tpu.memory_space<vmem>>) attributes {dimension_semantics = [#tpu.dimension_semantics<parallel>, #tpu.dimension_semantics<parallel>], iteration_bounds = array<i64: 1, 2>, scalar_prefetch = 0 : i64, scratch_operands = 0 : i64, tpu.core_type = #tpu.core_type<tc>, window_params = [{transform_indices = @transform_0, window_bounds = array<i64: 1, 16, 64>}, {pipeline_mode = #tpu.pipeline_mode<synchronous>, transform_indices = @transform_1, window_bounds = array<i64: 64, 32>}, {transform_indices = @transform_2, window_bounds = array<i64: 16, 32>}, {transform_indices = @transform_3, window_bounds = array<i64: 1, 16, 32>}]} {
    %c0 = arith.constant 0 : index
    %c0_0 = arith.constant 0 : index
    %c0_1 = arith.constant 0 : index
    %0 = vector.load %arg2[%c0, %c0_0, %c0_1] : memref<1x16x64xbf16, #tpu.memory_space<vmem>>, vector<1x16x64xbf16>
    %1 = vector.shape_cast %0 : vector<1x16x64xbf16> to vector<16x64xbf16>
    %c0_2 = arith.constant 0 : index
    %c0_3 = arith.constant 0 : index
    %2 = vector.load %arg3[%c0_2, %c0_3] : memref<64x32xbf16, #tpu.memory_space<vmem>>, vector<64x32xbf16>
    %cst = arith.constant dense<0.000000e+00> : vector<16x32xf32>
    %3 = tpu.matmul %1, %2, %cst {dimension_numbers = #tpu.dot_dimension_numbers<[1], [0], [0], [1], [0, 0, 1, 1], [], []>} : vector<16x64xbf16>, vector<64x32xbf16>, vector<16x32xf32> -> vector<16x32xf32>
    %c0_4 = arith.constant 0 : index
    %c0_5 = arith.constant 0 : index
    %4 = vector.load %arg4[%c0_4, %c0_5] : memref<16x32xbf16, #tpu.memory_space<vmem>>, vector<16x32xbf16>
    %5 = arith.extf %4 : vector<16x32xbf16> to vector<16x32xf32>
    %6 = arith.addf %3, %5 : vector<16x32xf32>
    %c0_6 = arith.constant 0 : index
    %c0_7 = arith.constant 0 : index
    %c0_8 = arith.constant 0 : index
    %7 = vector.load %arg5[%c0_6, %c0_7, %c0_8] : memref<1x16x32xf32, #tpu.memory_space<vmem>>, vector<1x16x32xf32>
    %8 = vector.shape_cast %7 : vector<1x16x32xf32> to vector<16x32xf32>
    %9 = vector.shape_cast %6 : vector<16x32xf32> to vector<1x16x32xf32>
    tpu.vector_store %arg5[%c0_6, %c0_7, %c0_8], %9 {strides = array<i32>} : memref<1x16x32xf32, #tpu.memory_space<vmem>>, vector<1x16x32xf32>,
    return
  }
  func.func @transform_0(%arg0: i32, %arg1: i32) -> (i32, i32, i32) {
    %c0_i32 = arith.constant 0 : i32
    %c0_i32_0 = arith.constant 0 : i32
    return %arg1, %arg0, %c0_i32 : i32, i32, i32
  }
  func.func @transform_1(%arg0: i32, %arg1: i32) -> (i32, i32) {
    %c0_i32 = arith.constant 0 : i32
    %c0_i32_0 = arith.constant 0 : i32
    %c0_i32_1 = arith.constant 0 : i32
    return %c0_i32, %c0_i32_0 : i32, i32
  }
  func.func @transform_2(%arg0: i32, %arg1: i32) -> (i32, i32) {
    %c0_i32 = arith.constant 0 : i32
    %c0_i32_0 = arith.constant 0 : i32
    return %arg0, %c0_i32 : i32, i32
  }
  func.func @transform_3(%arg0: i32, %arg1: i32) -> (i32, i32, i32) {
    %c0_i32 = arith.constant 0 : i32
    %c0_i32_0 = arith.constant 0 : i32
    return %arg1, %arg0, %c0_i32 : i32, i32, i32
  }
}

</mosaic_0001>

<llo_original>
// kernel: tpu_custom_call.1
$region0: #{tpu_custom_call.1}
  #allocation0 [shape = 'u32[]', space=smem, size = 0x4, offset = 0x4, fixed_abs, tag = 'smem constant byte address 0x4 - core index']
  #allocation1 [shape = 'u32[144,128]{1,0:T(1,128)}', space=vmem, size = 0x12000, scoped, tag = 'internal scratch']
  %s0 = inlined_call_operand.vmem [shape: bf16[2,16,64], index: 0, kind: input, shape index: {}]
  %s1 = inlined_call_operand.vmem [shape: bf16[64,32], index: 1, kind: input, shape index: {}]
  %s2 = inlined_call_operand.vmem [shape: bf16[16,32], index: 2, kind: input, shape index: {}]
  %s3 = inlined_call_operand.hbm [shape: f32[2,16,32], index: 3, kind: output, shape index: {}]
  %s4 = sld [smem:[#allocation0]]
  $region45: #{tpu_custom_call.1} parent=0
    _
  %s6 = ssub.s32 1, %s4
  %s7 = scalar_select 0, %s6, %s4
  $region1: #{tpu_custom_call.1} parent=0
    #allocation2 [shape = 'u8[16384]{0}', space=vmem, size = 0x4000, scoped, tag = 'output window, operand 0']
    #allocation3 [shape = 's32[2]{0}', space=sflag, size = 0x8, scoped, tag = 'scoped memory for tpu_custom_call.1']
    %8 = vsyncpa [#allocation3], 0
    %s9 = scalar_lea.sflag [#allocation3], 1
    %10 = vsyncpa %s9, 0
    loop: start=0, step=1, limit=4
    $region2: #{tpu_custom_call.1} parent=1 // loop_pre_header
      _
    $region3: #{tpu_custom_call.1} parent=1 // loop_header
      %s12 = sphi 0, %s16
      %p13 = scmp.ge.s32.totalorder %s12, 4
      %s19 = sphi 0, %s31
      %s20 = sphi 0, %s27
      %s21 = sphi 0, %s19
      %s22 = sphi 0, %s20
      %s23 = sphi 0, %s21
      %s24 = sphi 0, %s22
      %s36 = sphi 0, %s38
      %s39 = sphi 0, %s36
      %s40 = sphi 0, %s39
      %s56 = sphi 0, %s40
      %s60 = sphi 0, %s60
      %s62 = sphi 0, %s60
      %s63 = sphi 0, %s62
      %s77 = sphi 0, %s63
      %s83 = sphi 0, %s85
      %s86 = sphi 0, %s83
      %s87 = sphi 0, %s86
      %s103 = sphi 0, %s87
      %s111 = sphi 0, %s113
      %s114 = sphi 0, %s111
      %s115 = sphi 0, %s114
      %s131 = sphi 0, %s115
    $region4: #{tpu_custom_call.1} parent=1 // loop_header_branch
      %15 = sbr.rel (%p13) target = $region8
    $region5: #{tpu_custom_call.1} parent=1 // loop_body
      %s17 = ssub.s32 %s12, 1
      %s18 = ssub.s32 %s12, 2
      %s25 = sadd.s32 1, %s20
      %p26 = scmp.ge.s32.totalorder %s25, 2
      %s27 = scalar_select %p26, 0, %s25
      %s28 = sadd.s32 1, %s19
      %s29 = scalar_select %p26, %s28, %s19
      %p30 = scmp.ge.s32.totalorder %s29, 1
      %s31 = scalar_select %p30, 0, %s29
      %s32 = ssub.s32 %s20, %s27
      %s33 = ssub.s32 %s19, %s31
      %s34 = sor.u32 %s32, %s33
      %p35 = scmp.eq.s32.totalorder %s34, 0
      %s37 = sadd.s32 %s36, 1
      %s38 = scalar_select %p35, %s36, %s37
      %p41 = pneg %p35
      %p42 = scmp.eq.s32.totalorder %s12, 1
      %p43 = por %p41, %p42
      %p44 = scmp.ne.s32.totalorder %s36, %s39
      %p45 = scmp.eq.s32.totalorder %s12, 0
      %p46 = por %p44, %p45
      %p47 = scmp.ne.s32.totalorder %s36, %s39
      %p48 = scmp.eq.s32.totalorder %s17, 1
      %p49 = por %p47, %p48
      %p50 = scmp.ne.s32.totalorder %s39, %s40
      %p51 = scmp.eq.s32.totalorder %s17, 0
      %p52 = por %p50, %p51
      %p53 = scmp.ne.s32.totalorder %s39, %s40
      %p54 = scmp.eq.s32.totalorder %s18, 1
      %p55 = por %p53, %p54
      %p57 = scmp.ne.s32.totalorder %s40, %s56
      %p58 = scmp.eq.s32.totalorder %s18, 0
      %p59 = por %p57, %p58
      %s61 = sadd.s32 %s60, 1
      %p64 = scmp.eq.s32.totalorder %s12, 1
      %p65 = scmp.ne.s32.totalorder %s60, %s62
      %p66 = scmp.eq.s32.totalorder %s12, 0
      %p67 = por %p65, %p66
      %p68 = scmp.ne.s32.totalorder %s60, %s62
      %p69 = scmp.eq.s32.totalorder %s17, 1
      %p70 = por %p68, %p69
      %p71 = scmp.ne.s32.totalorder %s62, %s63
      %p72 = scmp.eq.s32.totalorder %s17, 0
      %p73 = por %p71, %p72
      %p74 = scmp.ne.s32.totalorder %s62, %s63
      %p75 = scmp.eq.s32.totalorder %s18, 1
      %p76 = por %p74, %p75
      %p78 = scmp.ne.s32.totalorder %s63, %s77
      %p79 = scmp.eq.s32.totalorder %s18, 0
      %p80 = por %p78, %p79
      %s81 = ssub.s32 %s19, %s31
      %p82 = scmp.eq.s32.totalorder %s81, 0
      %s84 = sadd.s32 %s83, 1
      %s85 = scalar_select %p82, %s83, %s84
      %p88 = pneg %p82
      %p89 = scmp.eq.s32.totalorder %s12, 1
      %p90 = por %p88, %p89
      %p91 = scmp.ne.s32.totalorder %s83, %s86
      %p92 = scmp.eq.s32.totalorder %s12, 0
      %p93 = por %p91, %p92
      %p94 = scmp.ne.s32.totalorder %s83, %s86
      %p95 = scmp.eq.s32.totalorder %s17, 1
      %p96 = por %p94, %p95
      %p97 = scmp.ne.s32.totalorder %s86, %s87
      %p98 = scmp.eq.s32.totalorder %s17, 0
      %p99 = por %p97, %p98
      %p100 = scmp.ne.s32.totalorder %s86, %s87
      %p101 = scmp.eq.s32.totalorder %s18, 1
      %p102 = por %p100, %p101
      %p104 = scmp.ne.s32.totalorder %s87, %s103
      %p105 = scmp.eq.s32.totalorder %s18, 0
      %p106 = por %p104, %p105
      %s107 = ssub.s32 %s20, %s27
      %s108 = ssub.s32 %s19, %s31
      %s109 = sor.u32 %s107, %s108
      %p110 = scmp.eq.s32.totalorder %s109, 0
      %s112 = sadd.s32 %s111, 1
      %s113 = scalar_select %p110, %s111, %s112
      %p116 = pneg %p110
      %p117 = scmp.eq.s32.totalorder %s12, 1
      %p118 = por %p116, %p117
      %p119 = scmp.ne.s32.totalorder %s111, %s114
      %p120 = scmp.eq.s32.totalorder %s12, 0
      %p121 = por %p119, %p120
      %p122 = scmp.ne.s32.totalorder %s111, %s114
      %p123 = scmp.eq.s32.totalorder %s17, 1
      %p124 = por %p122, %p123
      %p125 = scmp.ne.s32.totalorder %s114, %s115
      %p126 = scmp.eq.s32.totalorder %s17, 0
      %p127 = por %p125, %p126
      %p128 = scmp.ne.s32.totalorder %s114, %s115
      %p129 = scmp.eq.s32.totalorder %s18, 1
      %p130 = por %p128, %p129
      %p132 = scmp.ne.s32.totalorder %s115, %s131
      %p133 = scmp.eq.s32.totalorder %s18, 0
      %p134 = por %p132, %p133
      %p135 = scmp.le.s32.totalorder 1, %s12
      %p136 = scmp.lt.s32.totalorder %s12, 3
      %p137 = pnand %p135, %p136
      %p138 = pneg %p137
      // Predicated region
      $region9: #{tpu_custom_call.1} parent=5 // pred_check
        _
      $region10: #{tpu_custom_call.1} parent=5 // pred_check_branch
        %140 = sbr.rel (%p137) target = $region12
      $region11: #{tpu_custom_call.1} parent=5 // pred_region
        %s141 = ssub.s32 %s12, 1
        // Predicated region
        $region13: #{tpu_custom_call.1} parent=11 // pred_check
          %p142 = pneg %p73
        $region14: #{tpu_custom_call.1} parent=11 // pred_check_branch
          %144 = sbr.rel (%p142) target = $region16
        $region15: #{tpu_custom_call.1} parent=11 // pred_region
          _
        $region16: #{tpu_custom_call.1} parent=11 // pred_fallthru
          _
        // Predicated region
        $region17: #{tpu_custom_call.1} parent=11 // pred_check
          %p145 = pneg %p99
        $region18: #{tpu_custom_call.1} parent=11 // pred_check_branch
          %147 = sbr.rel (%p145) target = $region20
        $region19: #{tpu_custom_call.1} parent=11 // pred_region
          %s148 = smul.u32 2, %s21
          %p149 = scmp.lt.s32.totalorder %s148, 1
          %s150 = scalar_select %p149, %s148, 1
          %s151 = smul.addr %s150, 4
          %s152 = scalar_lea.vmem %s2, %s151
          %s153 = smul.u32 2, %s21
        $region20: #{tpu_custom_call.1} parent=11 // pred_fallthru
          _
      $region12: #{tpu_custom_call.1} parent=5 // pred_fallthru
        _
      %p154 = scmp.lt.s32.totalorder %s12, 2
      // Predicated region
      $region21: #{tpu_custom_call.1} parent=5 // pred_check
        %p155 = pneg %p154
      $region22: #{tpu_custom_call.1} parent=5 // pred_check_branch
        %157 = sbr.rel (%p155) target = $region24
      $region23: #{tpu_custom_call.1} parent=5 // pred_region
        // Predicated region
        $region25: #{tpu_custom_call.1} parent=23 // pred_check
          %p158 = pneg %p46
        $region26: #{tpu_custom_call.1} parent=23 // pred_check_branch
          %160 = sbr.rel (%p158) target = $region28
        $region27: #{tpu_custom_call.1} parent=23 // pred_region
          %s161 = smul.u32 2, %s19
          %p162 = scmp.lt.s32.totalorder %s20, 1
          %s163 = scalar_select %p162, %s20, 1
          %p164 = scmp.lt.s32.totalorder %s161, 1
          %s165 = scalar_select %p164, %s161, 1
          %s166 = smul.addr %s163, 2
          %s167 = sadd.s32 %s165, %s166
          %s168 = smul.addr %s167, 4
          %s169 = scalar_lea.vmem %s0, %s168
          %s170 = smul.u32 2, %s19
        $region28: #{tpu_custom_call.1} parent=23 // pred_fallthru
          _
      $region24: #{tpu_custom_call.1} parent=5 // pred_fallthru
        _
      %p171 = scmp.le.s32.totalorder 1, %s12
      %p172 = scmp.lt.s32.totalorder %s12, 3
      %p173 = pnand %p171, %p172
      %p174 = pneg %p173
      // Predicated region
      $region29: #{tpu_custom_call.1} parent=5 // pred_check
        _
      $region30: #{tpu_custom_call.1} parent=5 // pred_check_branch
        %176 = sbr.rel (%p173) target = $region32
      $region31: #{tpu_custom_call.1} parent=5 // pred_region
        %s177 = ssub.s32 %s12, 1
        %s178 = smul.u32 2, %s21
        %p179 = scmp.lt.s32.totalorder %s22, 1
        %s180 = scalar_select %p179, %s22, 1
        %p181 = scmp.lt.s32.totalorder %s178, 1
        %s182 = scalar_select %p181, %s178, 1
        %s183 = smul.addr %s180, 2
        %s184 = sadd.s32 %s182, %s183
        %s185 = smul.addr %s184, 4
        %s186 = scalar_lea.vmem %s0, %s185
        %p187 = pneg %p52
        %p188 = pneg %p49
        %p189 = pneg %p73
        %p190 = pneg %p70
        %s191 = smul.u32 2, %s21
        %p192 = scmp.lt.s32.totalorder %s191, 1
        %s193 = scalar_select %p192, %s191, 1
        %s194 = smul.addr %s193, 4
        %s195 = scalar_lea.vmem %s2, %s194
        %p196 = pneg %p99
        %p197 = pneg %p96
        %p198 = pneg %p127
        %p199 = pneg %p124
        %s200 = sand.u32 %s114, 1
        %s201 = scalar_lea.sflag [#allocation3], %s200
        %s202 = sand.u32 %s114, 1
        %s203 = smul.addr %s202, 16
        %s204 = scalar_lea.vmem [#allocation2], %s203
        %s205 = smul.u32 2, %s21
        %p206 = scmp.lt.s32.totalorder %s22, 1
        %s207 = scalar_select %p206, %s22, 1
        %p208 = scmp.lt.s32.totalorder %s205, 1
        %s209 = scalar_select %p208, %s205, 1
        %s210 = smul.addr %s207, 2
        %s211 = sadd.s32 %s209, %s210
        %s212 = smul.addr %s211, 4
        %s213 = scalar_lea.vmem %s0, %s212
        %s214 = smul.u32 2, %s21
        %s215 = smul.u32 2, %s21
        %p216 = scmp.lt.s32.totalorder %s215, 1
        %s217 = scalar_select %p216, %s215, 1
        %s218 = smul.addr %s217, 4
        %s219 = scalar_lea.vmem %s2, %s218
        %s220 = smul.u32 2, %s21
        %s221 = smul.u32 2, %s21
        %v223 = vld [vmem:[%s213] sm:$0xf]
        %v224 = vld [vmem:[%s213 + $0x4] sm:$0xf]
        %v225 = vld [vmem:[%s1] sm:$0xf]
        %v226 = vld [vmem:[%s1 + $0x4] sm:$0xf]
        %v227 = vld [vmem:[%s1 + $0x8] sm:$0xf]
        %v228 = vld [vmem:[%s1 + $0xc] sm:$0xf]
        %v229 = vld [vmem:[%s1 + $0x10] sm:$0xf]
        %v230 = vld [vmem:[%s1 + $0x14] sm:$0xf]
        %v231 = vld [vmem:[%s1 + $0x18] sm:$0xf]
        %v232 = vld [vmem:[%s1 + $0x1c] sm:$0xf]
        %v233 = vld [vmem:[%s219] sm:$0xf]
        %v234 = vld [vmem:[%s219 + $0x4] sm:$0xf]
        %v235 = vunpack.c.l.bf16 %v233
        %v236 = vunpack.c.l.bf16 %v234
        %v239 = vunpack.c.l.b16 %v223
        %v240 = vunpack.c.l.b16 %v224
        %v241 = vpack.c.b16 %v240, %v239
        %v250 = vunpack.c.l.b16 %v225
        %v251 = vunpack.c.l.b16 %v226
        %v252 = vunpack.c.l.b16 %v227
        %v253 = vunpack.c.l.b16 %v228
        %v254 = vunpack.c.l.b16 %v229
        %v255 = vunpack.c.l.b16 %v230
        %v256 = vunpack.c.l.b16 %v231
        %v257 = vunpack.c.l.b16 %v232
        %v258 = vpack.c.b16 %v251, %v250
        %v259 = vpack.c.b16 %v253, %v252
        %v260 = vpack.c.b16 %v255, %v254
        %v261 = vpack.c.b16 %v257, %v256
        %vm266 = vcmask 523264
        %v268 = vsel %vm266, %v241, 0
        %270 = vmatprep.subr.bf16.mxu0 0
        %271 = vmatpush1.bf16.msra.mxu0 %v258
        %272 = vmatprep.subr.bf16.mxu0 0
        %273 = vmatpush1.bf16.msra.mxu0 %v259
        %274 = vmatprep.subr.bf16.mxu0 0
        %275 = vmatpush1.bf16.msra.mxu0 %v260
        %276 = vmatprep.subr.bf16.mxu0 0
        %277 = vmatpush1.bf16.msra.mxu0 %v261
        %278 = vmatprep.subr.bf16.mxu0 0
        %279 = vmatpush1.bf16.msra.mxu0 0
        %280 = vmatprep.subr.bf16.mxu0 0
        %281 = vmatpush1.bf16.msra.mxu0 0
        %282 = vmatprep.subr.bf16.mxu0 0
        %283 = vmatpush1.bf16.msra.mxu0 0
        %284 = vmatprep.subr.bf16.mxu0 0
        %285 = vmatpush1.bf16.msra.mxu0 0
        %286 = vmatprep.subr.bf16.mxu0 0
        %287 = vmatpush1.bf16.msra.mxu0 0
        %288 = vmatprep.subr.bf16.mxu0 0
        %289 = vmatpush1.bf16.msra.mxu0 0
        %290 = vmatprep.subr.bf16.mxu0 0
        %291 = vmatpush1.bf16.msra.mxu0 0
        %292 = vmatprep.subr.bf16.mxu0 0
        %293 = vmatpush1.bf16.msra.mxu0 0
        %294 = vmatprep.subr.bf16.mxu0 0
        %295 = vmatpush1.bf16.msra.mxu0 0
        %296 = vmatprep.subr.bf16.mxu0 0
        %297 = vmatpush1.bf16.msra.mxu0 0
        %298 = vmatprep.subr.bf16.mxu0 0
        %299 = vmatpush1.bf16.msra.mxu0 0
        %300 = vmatprep.subr.bf16.mxu0 0
        %301 = vmatpush1.bf16.msra.mxu0 0
        %302 = vmatprep.mubr.bf16.mxu0 0
        %303 = vmatmul.mubr.bf16.gmra.mrb[0].mxu0 %v268
        %v304 = vpop.f32.mrb[0].mxu0
        %v305 = vadd.f32 %v235, %v304
        %v306 = vpop.f32.mrb[0].mxu0
        %v307 = vpop.f32.mrb[0].mxu0
        %v308 = vadd.f32 %v236, %v307
        %v309 = vpop.f32.mrb[0].mxu0
        %310 = vdwg.mxu0
        %vm311 = vcmask 261120
        %312 = vst.msk [vmem:[%s204] sm:$0xff] %vm311, %v305
        %313 = vst.msk [vmem:[%s204 + $0x8] sm:$0xff] %vm311, %v308
        %s314 = sand.u32 %s114, 1
        %s315 = scalar_lea.sflag [#allocation3], %s314
        %s316 = sand.u32 %s114, 1
        %s317 = smul.addr %s316, 16
        %s318 = scalar_lea.vmem [#allocation2], %s317
        // Predicated region
        $region33: #{tpu_custom_call.1} parent=31 // pred_check
          %p319 = pneg %p124
        $region34: #{tpu_custom_call.1} parent=31 // pred_check_branch
          %321 = sbr.rel (%p319) target = $region36
        $region35: #{tpu_custom_call.1} parent=31 // pred_region
          %s322 = smul.u32 2, %s21
          %s324 = ssub.s32 256, 256
          %325 = vsyncadd %s315, %s324
          %s326 = smul.addr %s22, 2
          %s327 = sadd.s32 %s322, %s326
          %s328 = smul.addr %s327, 128
          %s329 = scalar_lea.hbm %s3, %s328
          %s330 = sshll.u32 %s318, 4
          %s331 = int_to_ptr.vmem [resolvable:$true] %s330
          %336 = dma.vmem_to_hbm [thread:$0]  %s331, 256, %s329, %s315, 128, 128, 8
        $region36: #{tpu_custom_call.1} parent=31 // pred_fallthru
          _
      $region32: #{tpu_custom_call.1} parent=5 // pred_fallthru
        _
      %p337 = scmp.le.s32.totalorder 2, %s12
      // Predicated region
      $region37: #{tpu_custom_call.1} parent=5 // pred_check
        %p338 = pneg %p337
      $region38: #{tpu_custom_call.1} parent=5 // pred_check_branch
        %340 = sbr.rel (%p338) target = $region40
      $region39: #{tpu_custom_call.1} parent=5 // pred_region
        %s341 = ssub.s32 %s12, 2
        // Predicated region
        $region41: #{tpu_custom_call.1} parent=39 // pred_check
          %p342 = pneg %p130
        $region42: #{tpu_custom_call.1} parent=39 // pred_check_branch
          %344 = sbr.rel (%p342) target = $region44
        $region43: #{tpu_custom_call.1} parent=39 // pred_region
          %s345 = sand.u32 %s115, 1
          %s346 = scalar_lea.sflag [#allocation3], %s345
          %s347 = sand.u32 %s115, 1
          %s348 = smul.addr %s347, 16
          %s349 = scalar_lea.vmem [#allocation2], %s348
          %350 = dma.done %s346, 256
        $region44: #{tpu_custom_call.1} parent=39 // pred_fallthru
          _
      $region40: #{tpu_custom_call.1} parent=5 // pred_fallthru
        _
    $region6: #{tpu_custom_call.1} parent=1 // loop_footer
      %s16 = sadd.s32 1, %s12
    $region7: #{tpu_custom_call.1} parent=1 // loop_footer_branch
      %11 = sbr.rel target = $region3
    $region8: #{tpu_custom_call.1} parent=1 // loop_exit
      _
    %351 = vsyncpa [#allocation3], 1
    %s352 = scalar_lea.sflag [#allocation3], 1
    %353 = vsyncpa %s352, 1

</llo_original>
